<compile_context>
chip_gen: v5e
topology: v5e:2x2
jax: 0.10.0
libtpu: 0.0.40
codegen_flags: <defaults>
</compile_context>

<pallas_src>
import jax
import jax.numpy as jnp
from jax.experimental import pallas as pl
from jax.experimental.pallas import tpu as pltpu

# ---------------- test config (small but lane-dense / MXU-shaped) ----------------
B = 2          # batch
S = 8          # sequence length
H = 128        # hidden_size            (multiple of 128 -> lane-dense)
INTER = 1024   # intermediate_size      (multiple of 128)


def _round_up(x, m):
    return (x + m - 1) // m * m


# ---------------------------------- kernel ----------------------------------
def qwen2_mlp_kernel(x_ref, wg_ref, wu_ref, wd_ref, o_ref, acc_ref):
    """Grid = (token tiles, intermediate tiles); intermediate is the reduction axis.

    x_ref  : (tm, H)   bf16, resident across the intermediate axis
    wg_ref : (H, ti)   bf16 gate_proj.weight^T tile (z-folded at prep time)
    wu_ref : (H, ti)   bf16 up_proj.weight^T tile   (intermediate_z folded in)
    wd_ref : (ti, H)   bf16 down_proj.weight^T tile (mlp_z*hidden_z folded in)
    o_ref  : (tm, H)   output tile (same block across the reduction axis)
    acc_ref: (tm, H)   fp32 VMEM accumulator
    """
    i = pl.program_id(1)

    @pl.when(i == 0)
    def _init():
        acc_ref[...] = jnp.zeros_like(acc_ref)

    x = x_ref[...]                                                     # (tm, H) bf16
    gate = jnp.dot(x, wg_ref[...], preferred_element_type=jnp.float32)  # (tm, ti) f32
    up = jnp.dot(x, wu_ref[...], preferred_element_type=jnp.float32)    # (tm, ti) f32

    # SiLU in fp32: exp on the EUP, reciprocal (approx) also on the EUP slot.
    silu = gate * pl.reciprocal(1.0 + jnp.exp(-gate), approx=True)
    h = (silu * up).astype(x.dtype)                                    # bf16 for MXU

    acc_ref[...] += jnp.dot(h, wd_ref[...], preferred_element_type=jnp.float32)

    @pl.when(i == pl.num_programs(1) - 1)
    def _store():
        o_ref[...] = acc_ref[...].astype(o_ref.dtype)


# ------------------------- one-time weight preparation -------------------------
def prepare_qwen2_mlp_weights(w_gate, w_up, w_down,
                              intermediate_z=None, mlp_z=None, hidden_z=None,
                              compute_dtype=jnp.bfloat16):
    """Transpose PyTorch nn.Linear weights (out,in) to matmul layout, fold the
    pruning multipliers in, and cast to the MXU compute dtype.  Call ONCE at
    weight-load time (not per forward)."""
    inter, hidden = w_gate.shape
    wg_t = jnp.asarray(w_gate, jnp.float32).T          # (H, I)
    wu_t = jnp.asarray(w_up, jnp.float32).T            # (H, I)
    wd_t = jnp.asarray(w_down, jnp.float32).T          # (I, H)

    if intermediate_z is not None:
        # (x @ Wu^T) * iz  ==  x @ (Wu^T * iz[cols])
        wu_t = wu_t * jnp.asarray(intermediate_z, jnp.float32).reshape(1, inter)

    dz = None
    if mlp_z is not None:
        dz = jnp.asarray(mlp_z, jnp.float32).reshape(1, -1)
    if hidden_z is not None:
        hz = jnp.asarray(hidden_z, jnp.float32).reshape(1, hidden)
        dz = hz if dz is None else dz * hz
    if dz is not None:
        # (h @ Wd^T) * dz  ==  h @ (Wd^T * dz[cols])
        wd_t = wd_t * dz

    return (wg_t.astype(compute_dtype),
            wu_t.astype(compute_dtype),
            wd_t.astype(compute_dtype))


# ----------------------------------- forward -----------------------------------
def qwen2_mlp(hidden_state, wg_t, wu_t, wd_t, *, tm_cap=256, ti_cap=512):
    """hidden_state: (B, S, H).  wg_t/wu_t: (H, I), wd_t: (I, H) from
    prepare_qwen2_mlp_weights."""
    b, s, h = hidden_state.shape
    inter = wg_t.shape[1]
    assert wg_t.shape == (h, inter) and wu_t.shape == (h, inter)
    assert wd_t.shape == (inter, h)
    assert inter % 128 == 0, "intermediate_size must be a multiple of 128"

    # --- tile selection ---
    t = b * s
    tm = min(tm_cap, _round_up(t, 8))           # token tile (sublane multiple of 8)
    t_pad = _round_up(t, tm)

    ti = min(ti_cap, inter)                      # intermediate tile (lane mult of 128)
    while inter % ti != 0 or ti % 128 != 0:
        ti -= 128
    assert ti >= 128

    grid = (t_pad // tm, inter // ti)

    # --- input prep (tiny compared to weight traffic) ---
    x2d = hidden_state.reshape(t, h).astype(wg_t.dtype)
    if t_pad != t:
        x2d = jnp.pad(x2d, ((0, t_pad - t), (0, 0)))

    # --- VMEM budget: double-buffered bf16 tiles + fp32 acc/out, with headroom ---
    wbytes = jnp.dtype(wg_t.dtype).itemsize
    vmem_est = (2 * tm * h * wbytes            # x
                + 2 * 2 * h * ti * wbytes      # wg, wu
                + 2 * ti * h * wbytes          # wd
                + 2 * tm * h * 4               # out
                + tm * h * 4)                  # acc scratch
    vmem_limit = int(min(max(2 * vmem_est, 32 << 20), 64 << 20))

    out2d = pl.pallas_call(
        qwen2_mlp_kernel,
        out_shape=jax.ShapeDtypeStruct((t_pad, h), hidden_state.dtype),
        grid=grid,
        in_specs=[
            pl.BlockSpec((tm, h), lambda tk, ik: (tk, 0)),    # x (resident over I)
            pl.BlockSpec((h, ti), lambda tk, ik: (0, ik)),    # gate W^T stream
            pl.BlockSpec((h, ti), lambda tk, ik: (0, ik)),    # up   W^T stream
            pl.BlockSpec((ti, h), lambda tk, ik: (ik, 0)),    # down W^T stream
        ],
        out_specs=pl.BlockSpec((tm, h), lambda tk, ik: (tk, 0)),
        scratch_shapes=[pltpu.VMEM((tm, h), jnp.float32)],
        compiler_params=pltpu.CompilerParams(
            dimension_semantics=("parallel", "arbitrary"),
            vmem_limit_bytes=vmem_limit),
    )(x2d, wg_t, wu_t, wd_t)

    if t_pad != t:
        out2d = out2d[:t]
    return out2d.reshape(b, s, h)


# ---------------- pure-JAX reference (mirrors Qwen2MLP.forward) ----------------
def reference(hidden_state, w_gate, w_up, w_down,
              intermediate_z=None, mlp_z=None, hidden_z=None):
    gate = jax.nn.silu(hidden_state @ w_gate.T)
    up = hidden_state @ w_up.T
    if intermediate_z is not None:
        up = up * intermediate_z
    down = (gate * up) @ w_down.T
    if mlp_z is not None:
        down = down * mlp_z
    if hidden_z is not None:
        down = down * hidden_z
    return down


if __name__ == "__main__":
    key = jax.random.PRNGKey(0)
    k = jax.random.split(key, 6)
    scale = 0.02
    x = jax.random.normal(k[0], (B, S, H), jnp.float32)
    w_gate = jax.random.normal(k[1], (INTER, H), jnp.float32) * scale   # (I, H)
    w_up = jax.random.normal(k[2], (INTER, H), jnp.float32) * scale     # (I, H)
    w_down = jax.random.normal(k[3], (H, INTER), jnp.float32) * scale   # (H, I)

    # bf16 matmuls + approx-reciprocal sigmoid vs fp32 reference
    ATOL, RTOL = 5e-3, 5e-2

    # --- plain forward (no pruning masks) ---
    wg_t, wu_t, wd_t = prepare_qwen2_mlp_weights(w_gate, w_up, w_down)
    out = qwen2_mlp(x, wg_t, wu_t, wd_t)
    out = jax.block_until_ready(out)
    with jax.default_matmul_precision("highest"):
        ref = reference(x, w_gate, w_up, w_down)
    assert out.shape == (B, S, H)
    assert jnp.allclose(out, ref, atol=ATOL, rtol=RTOL), \
        f"max abs err {jnp.max(jnp.abs(out - ref))}"

    # --- forward with pruning masks (intermediate_z / mlp_z / hidden_z) ---
    intermediate_z = (jax.random.uniform(k[4], (INTER,)) > 0.3).astype(jnp.float32)
    mlp_z = jnp.float32(0.8)
    hidden_z = (jax.random.uniform(k[5], (H,)) > 0.2).astype(jnp.float32)

    wg_tz, wu_tz, wd_tz = prepare_qwen2_mlp_weights(
        w_gate, w_up, w_down, intermediate_z, mlp_z, hidden_z)
    out_z = qwen2_mlp(x, wg_tz, wu_tz, wd_tz)
    out_z = jax.block_until_ready(out_z)
    with jax.default_matmul_precision("highest"):
        ref_z = reference(x, w_gate, w_up, w_down, intermediate_z, mlp_z, hidden_z)
    assert jnp.allclose(out_z, ref_z, atol=ATOL, rtol=RTOL), \
        f"max abs err {jnp.max(jnp.abs(out_z - ref_z))}"

    print("KERNEL_OK")
</pallas_src>

<mosaic_0001>
module attributes {stable_mosaic.version = 11 : i64} {
  func.func @qwen2_mlp_kernel(%arg0: i32, %arg1: i32, %arg2: memref<16x128xbf16, #tpu.memory_space<vmem>>, %arg3: memref<128x512xbf16, #tpu.memory_space<vmem>>, %arg4: memref<128x512xbf16, #tpu.memory_space<vmem>>, %arg5: memref<512x128xbf16, #tpu.memory_space<vmem>>, %arg6: memref<16x128xf32, #tpu.memory_space<vmem>>, %arg7: memref<16x128xf32, #tpu.memory_space<vmem>>) attributes {dimension_semantics = [#tpu.dimension_semantics<parallel>, #tpu.dimension_semantics<arbitrary>], iteration_bounds = array<i64: 1, 2>, scalar_prefetch = 0 : i64, scratch_operands = 1 : i64, tpu.core_type = #tpu.core_type<tc>, window_params = [{transform_indices = @transform_0, window_bounds = array<i64: 16, 128>}, {transform_indices = @transform_1, window_bounds = array<i64: 128, 512>}, {transform_indices = @transform_2, window_bounds = array<i64: 128, 512>}, {transform_indices = @transform_3, window_bounds = array<i64: 512, 128>}, {transform_indices = @transform_4, window_bounds = array<i64: 16, 128>}]} {
    %c0_i32 = arith.constant 0 : i32
    %0 = arith.cmpi eq, %arg1, %c0_i32 : i32
    %1 = arith.extui %0 : i1 to i32
    %c0_i32_0 = arith.constant 0 : i32
    %2 = arith.cmpi ne, %1, %c0_i32_0 : i32
    scf.if %2 {
      %cst_17 = arith.constant 0.000000e+00 : f32
      %25 = vector.broadcast %cst_17 : f32 to vector<16x128xf32>
      %c0_18 = arith.constant 0 : index
      %c0_19 = arith.constant 0 : index
      %26 = vector.load %arg7[%c0_18, %c0_19] : memref<16x128xf32, #tpu.memory_space<vmem>>, vector<16x128xf32>
      tpu.vector_store %arg7[%c0_18, %c0_19], %25 {strides = array<i32>} : memref<16x128xf32, #tpu.memory_space<vmem>>, vector<16x128xf32>,
    } else {
    }
    %c0 = arith.constant 0 : index
    %c0_1 = arith.constant 0 : index
    %3 = vector.load %arg2[%c0, %c0_1] : memref<16x128xbf16, #tpu.memory_space<vmem>>, vector<16x128xbf16>
    %c0_2 = arith.constant 0 : index
    %c0_3 = arith.constant 0 : index
    %4 = vector.load %arg3[%c0_2, %c0_3] : memref<128x512xbf16, #tpu.memory_space<vmem>>, vector<128x512xbf16>
    %cst = arith.constant dense<0.000000e+00> : vector<16x512xf32>
    %5 = tpu.matmul %3, %4, %cst {dimension_numbers = #tpu.dot_dimension_numbers<[1], [0], [0], [1], [0, 0, 1, 1], [], []>} : vector<16x128xbf16>, vector<128x512xbf16>, vector<16x512xf32> -> vector<16x512xf32>
    %c0_4 = arith.constant 0 : index
    %c0_5 = arith.constant 0 : index
    %6 = vector.load %arg4[%c0_4, %c0_5] : memref<128x512xbf16, #tpu.memory_space<vmem>>, vector<128x512xbf16>
    %cst_6 = arith.constant dense<0.000000e+00> : vector<16x512xf32>
    %7 = tpu.matmul %3, %6, %cst_6 {dimension_numbers = #tpu.dot_dimension_numbers<[1], [0], [0], [1], [0, 0, 1, 1], [], []>} : vector<16x128xbf16>, vector<128x512xbf16>, vector<16x512xf32> -> vector<16x512xf32>
    %cst_7 = arith.constant 0.000000e+00 : f32
    %8 = vector.broadcast %cst_7 : f32 to vector<16x512xf32>
    %9 = arith.subf %8, %5 : vector<16x512xf32>
    %10 = math.exp %9 : vector<16x512xf32>
    %cst_8 = arith.constant 1.000000e+00 : f32
    %11 = vector.broadcast %cst_8 : f32 to vector<16x512xf32>
    %12 = arith.addf %11, %10 : vector<16x512xf32>
    %13 = tpu.reciprocal %12 {approx = true} : vector<16x512xf32> -> vector<16x512xf32>
    %14 = arith.mulf %5, %13 : vector<16x512xf32>
    %15 = arith.mulf %14, %7 : vector<16x512xf32>
    %16 = arith.truncf %15 : vector<16x512xf32> to vector<16x512xbf16>
    %c0_9 = arith.constant 0 : index
    %c0_10 = arith.constant 0 : index
    %17 = vector.load %arg7[%c0_9, %c0_10] : memref<16x128xf32, #tpu.memory_space<vmem>>, vector<16x128xf32>
    %c0_11 = arith.constant 0 : index
    %c0_12 = arith.constant 0 : index
    %18 = vector.load %arg5[%c0_11, %c0_12] : memref<512x128xbf16, #tpu.memory_space<vmem>>, vector<512x128xbf16>
    %cst_13 = arith.constant dense<0.000000e+00> : vector<16x128xf32>
    %19 = tpu.matmul %16, %18, %cst_13 {dimension_numbers = #tpu.dot_dimension_numbers<[1], [0], [0], [1], [0, 0, 1, 1], [], []>} : vector<16x512xbf16>, vector<512x128xbf16>, vector<16x128xf32> -> vector<16x128xf32>
    %20 = arith.addf %17, %19 : vector<16x128xf32>
    %c0_14 = arith.constant 0 : index
    %c0_15 = arith.constant 0 : index
    %21 = vector.load %arg7[%c0_14, %c0_15] : memref<16x128xf32, #tpu.memory_space<vmem>>, vector<16x128xf32>
    tpu.vector_store %arg7[%c0_14, %c0_15], %20 {strides = array<i32>} : memref<16x128xf32, #tpu.memory_space<vmem>>, vector<16x128xf32>,
    %c1_i32 = arith.constant 1 : i32
    %22 = arith.cmpi eq, %arg1, %c1_i32 : i32
    %23 = arith.extui %22 : i1 to i32
    %c0_i32_16 = arith.constant 0 : i32
    %24 = arith.cmpi ne, %23, %c0_i32_16 : i32
    scf.if %24 {
      %c0_17 = arith.constant 0 : index
      %c0_18 = arith.constant 0 : index
      %25 = vector.load %arg7[%c0_17, %c0_18] : memref<16x128xf32, #tpu.memory_space<vmem>>, vector<16x128xf32>
      %c0_19 = arith.constant 0 : index
      %c0_20 = arith.constant 0 : index
      %26 = vector.load %arg6[%c0_19, %c0_20] : memref<16x128xf32, #tpu.memory_space<vmem>>, vector<16x128xf32>
      tpu.vector_store %arg6[%c0_19, %c0_20], %25 {strides = array<i32>} : memref<16x128xf32, #tpu.memory_space<vmem>>, vector<16x128xf32>,
    } else {
    }
    return
  }
  func.func @transform_0(%arg0: i32, %arg1: i32) -> (i32, i32) {
    %c0_i32 = arith.constant 0 : i32
    %c0_i32_0 = arith.constant 0 : i32
    return %arg0, %c0_i32 : i32, i32
  }
  func.func @transform_1(%arg0: i32, %arg1: i32) -> (i32, i32) {
    %c0_i32 = arith.constant 0 : i32
    %c0_i32_0 = arith.constant 0 : i32
    return %c0_i32, %arg1 : i32, i32
  }
  func.func @transform_2(%arg0: i32, %arg1: i32) -> (i32, i32) {
    %c0_i32 = arith.constant 0 : i32
    %c0_i32_0 = arith.constant 0 : i32
    return %c0_i32, %arg1 : i32, i32
  }
  func.func @transform_3(%arg0: i32, %arg1: i32) -> (i32, i32) {
    %c0_i32 = arith.constant 0 : i32
    %c0_i32_0 = arith.constant 0 : i32
    return %arg1, %c0_i32 : i32, i32
  }
  func.func @transform_4(%arg0: i32, %arg1: i32) -> (i32, i32) {
    %c0_i32 = arith.constant 0 : i32
    %c0_i32_0 = arith.constant 0 : i32
    return %arg0, %c0_i32 : i32, i32
  }
}

</mosaic_0001>

<llo_original>
// kernel: tpu_custom_call.1
$region0: #{tpu_custom_call.1}
  #allocation0 [shape = 'u32[]', space=smem, size = 0x4, offset = 0x4, fixed_abs, tag = 'smem constant byte address 0x4 - core index']
  #allocation1 [shape = 'u32[72,128]{1,0:T(1,128)}', space=vmem, size = 0x9000, scoped, tag = 'internal scratch']
  #allocation2 [shape = 'f32[16,128]{1,0:T(8,128)}', space=vmem, size = 0x2000, scoped, tag = 'scratch operand']
  %s0 = inlined_call_operand.hbm [shape: bf16[16,128], index: 0, kind: input, shape index: {}]
  %s1 = inlined_call_operand.hbm [shape: bf16[128,1024], index: 1, kind: input, shape index: {}]
  %s2 = inlined_call_operand.hbm [shape: bf16[128,1024], index: 2, kind: input, shape index: {}]
  %s3 = inlined_call_operand.hbm [shape: bf16[1024,128], index: 3, kind: input, shape index: {}]
  %s4 = inlined_call_operand.hbm [shape: f32[16,128], index: 4, kind: output, shape index: {}]
  %s5 = sld [smem:[#allocation0]]
  $region73: #{tpu_custom_call.1} parent=0
    _
  %s7 = ssub.s32 1, %s5
  %s8 = scalar_select 0, %s7, %s5
  $region1: #{tpu_custom_call.1} parent=0
    #allocation3 [shape = 'u8[4096]{0}', space=vmem, size = 0x1000, scoped, tag = 'input window, operand 0, single buffered']
    #allocation4 [shape = 's32[2]{0}', space=sflag, size = 0x8, scoped, tag = 'scoped memory for tpu_custom_call.1']
    #allocation5 [shape = 's32[2]{0}', space=sflag, size = 0x8, scoped, tag = 'scoped memory for tpu_custom_call.1']
    #allocation6 [shape = 'u8[262144]{0}', space=vmem, size = 0x40000, scoped, tag = 'input window, operand 1']
    #allocation7 [shape = 's32[2]{0}', space=sflag, size = 0x8, scoped, tag = 'scoped memory for tpu_custom_call.1']
    #allocation8 [shape = 'u8[262144]{0}', space=vmem, size = 0x40000, scoped, tag = 'input window, operand 2']
    #allocation9 [shape = 'u8[262144]{0}', space=vmem, size = 0x40000, scoped, tag = 'input window, operand 3']
    #allocation10 [shape = 's32[2]{0}', space=sflag, size = 0x8, scoped, tag = 'scoped memory for tpu_custom_call.1']
    #allocation11 [shape = 'u8[8192]{0}', space=vmem, size = 0x2000, scoped, tag = 'output window, operand 0, single buffered']
    %9 = vsyncpa [#allocation4], 0
    %10 = vsyncpa [#allocation7], 0
    %s11 = scalar_lea.sflag [#allocation7], 1
    %12 = vsyncpa %s11, 0
    %13 = vsyncpa [#allocation10], 0
    %s14 = scalar_lea.sflag [#allocation10], 1
    %15 = vsyncpa %s14, 0
    %16 = vsyncpa [#allocation5], 0
    loop: start=0, step=1, limit=4
    $region2: #{tpu_custom_call.1} parent=1 // loop_pre_header
      _
    $region3: #{tpu_custom_call.1} parent=1 // loop_header
      %s18 = sphi 0, %s22
      %p19 = scmp.ge.s32.totalorder %s18, 4
      %s25 = sphi 0, %s37
      %s26 = sphi 0, %s33
      %s27 = sphi 0, %s25
      %s28 = sphi 0, %s26
      %s29 = sphi 0, %s27
      %s30 = sphi 0, %s28
      %s40 = sphi 0, %s42
      %s43 = sphi 0, %s40
      %s44 = sphi 0, %s43
      %s60 = sphi 0, %s44
      %s66 = sphi 0, %s68
      %s69 = sphi 0, %s66
      %s70 = sphi 0, %s69
      %s86 = sphi 0, %s70
      %s92 = sphi 0, %s94
      %s95 = sphi 0, %s92
      %s96 = sphi 0, %s95
      %s112 = sphi 0, %s96
      %s118 = sphi 0, %s120
      %s121 = sphi 0, %s118
      %s122 = sphi 0, %s121
      %s138 = sphi 0, %s122
      %s144 = sphi 0, %s146
      %s147 = sphi 0, %s144
      %s148 = sphi 0, %s147
      %s164 = sphi 0, %s148
    $region4: #{tpu_custom_call.1} parent=1 // loop_header_branch
      %21 = sbr.rel (%p19) target = $region8
    $region5: #{tpu_custom_call.1} parent=1 // loop_body
      %s23 = ssub.s32 %s18, 1
      %s24 = ssub.s32 %s18, 2
      %s31 = sadd.s32 1, %s26
      %p32 = scmp.ge.s32.totalorder %s31, 2
      %s33 = scalar_select %p32, 0, %s31
      %s34 = sadd.s32 1, %s25
      %s35 = scalar_select %p32, %s34, %s25
      %p36 = scmp.ge.s32.totalorder %s35, 1
      %s37 = scalar_select %p36, 0, %s35
      %s38 = ssub.s32 %s25, %s37
      %p39 = scmp.eq.s32.totalorder %s38, 0
      %s41 = sadd.s32 %s40, 1
      %s42 = scalar_select %p39, %s40, %s41
      %p45 = pneg %p39
      %p46 = scmp.eq.s32.totalorder %s18, 1
      %p47 = por %p45, %p46
      %p48 = scmp.ne.s32.totalorder %s40, %s43
      %p49 = scmp.eq.s32.totalorder %s18, 0
      %p50 = por %p48, %p49
      %p51 = scmp.ne.s32.totalorder %s40, %s43
      %p52 = scmp.eq.s32.totalorder %s23, 1
      %p53 = por %p51, %p52
      %p54 = scmp.ne.s32.totalorder %s43, %s44
      %p55 = scmp.eq.s32.totalorder %s23, 0
      %p56 = por %p54, %p55
      %p57 = scmp.ne.s32.totalorder %s43, %s44
      %p58 = scmp.eq.s32.totalorder %s24, 1
      %p59 = por %p57, %p58
      %p61 = scmp.ne.s32.totalorder %s44, %s60
      %p62 = scmp.eq.s32.totalorder %s24, 0
      %p63 = por %p61, %p62
      %s64 = ssub.s32 %s26, %s33
      %p65 = scmp.eq.s32.totalorder %s64, 0
      %s67 = sadd.s32 %s66, 1
      %s68 = scalar_select %p65, %s66, %s67
      %p71 = pneg %p65
      %p72 = scmp.eq.s32.totalorder %s18, 1
      %p73 = por %p71, %p72
      %p74 = scmp.ne.s32.totalorder %s66, %s69
      %p75 = scmp.eq.s32.totalorder %s18, 0
      %p76 = por %p74, %p75
      %p77 = scmp.ne.s32.totalorder %s66, %s69
      %p78 = scmp.eq.s32.totalorder %s23, 1
      %p79 = por %p77, %p78
      %p80 = scmp.ne.s32.totalorder %s69, %s70
      %p81 = scmp.eq.s32.totalorder %s23, 0
      %p82 = por %p80, %p81
      %p83 = scmp.ne.s32.totalorder %s69, %s70
      %p84 = scmp.eq.s32.totalorder %s24, 1
      %p85 = por %p83, %p84
      %p87 = scmp.ne.s32.totalorder %s70, %s86
      %p88 = scmp.eq.s32.totalorder %s24, 0
      %p89 = por %p87, %p88
      %s90 = ssub.s32 %s26, %s33
      %p91 = scmp.eq.s32.totalorder %s90, 0
      %s93 = sadd.s32 %s92, 1
      %s94 = scalar_select %p91, %s92, %s93
      %p97 = pneg %p91
      %p98 = scmp.eq.s32.totalorder %s18, 1
      %p99 = por %p97, %p98
      %p100 = scmp.ne.s32.totalorder %s92, %s95
      %p101 = scmp.eq.s32.totalorder %s18, 0
      %p102 = por %p100, %p101
      %p103 = scmp.ne.s32.totalorder %s92, %s95
      %p104 = scmp.eq.s32.totalorder %s23, 1
      %p105 = por %p103, %p104
      %p106 = scmp.ne.s32.totalorder %s95, %s96
      %p107 = scmp.eq.s32.totalorder %s23, 0
      %p108 = por %p106, %p107
      %p109 = scmp.ne.s32.totalorder %s95, %s96
      %p110 = scmp.eq.s32.totalorder %s24, 1
      %p111 = por %p109, %p110
      %p113 = scmp.ne.s32.totalorder %s96, %s112
      %p114 = scmp.eq.s32.totalorder %s24, 0
      %p115 = por %p113, %p114
      %s116 = ssub.s32 %s26, %s33
      %p117 = scmp.eq.s32.totalorder %s116, 0
      %s119 = sadd.s32 %s118, 1
      %s120 = scalar_select %p117, %s118, %s119
      %p123 = pneg %p117
      %p124 = scmp.eq.s32.totalorder %s18, 1
      %p125 = por %p123, %p124
      %p126 = scmp.ne.s32.totalorder %s118, %s121
      %p127 = scmp.eq.s32.totalorder %s18, 0
      %p128 = por %p126, %p127
      %p129 = scmp.ne.s32.totalorder %s118, %s121
      %p130 = scmp.eq.s32.totalorder %s23, 1
      %p131 = por %p129, %p130
      %p132 = scmp.ne.s32.totalorder %s121, %s122
      %p133 = scmp.eq.s32.totalorder %s23, 0
      %p134 = por %p132, %p133
      %p135 = scmp.ne.s32.totalorder %s121, %s122
      %p136 = scmp.eq.s32.totalorder %s24, 1
      %p137 = por %p135, %p136
      %p139 = scmp.ne.s32.totalorder %s122, %s138
      %p140 = scmp.eq.s32.totalorder %s24, 0
      %p141 = por %p139, %p140
      %s142 = ssub.s32 %s25, %s37
      %p143 = scmp.eq.s32.totalorder %s142, 0
      %s145 = sadd.s32 %s144, 1
      %s146 = scalar_select %p143, %s144, %s145
      %p149 = pneg %p143
      %p150 = scmp.eq.s32.totalorder %s18, 1
      %p151 = por %p149, %p150
      %p152 = scmp.ne.s32.totalorder %s144, %s147
      %p153 = scmp.eq.s32.totalorder %s18, 0
      %p154 = por %p152, %p153
      %p155 = scmp.ne.s32.totalorder %s144, %s147
      %p156 = scmp.eq.s32.totalorder %s23, 1
      %p157 = por %p155, %p156
      %p158 = scmp.ne.s32.totalorder %s147, %s148
      %p159 = scmp.eq.s32.totalorder %s23, 0
      %p160 = por %p158, %p159
      %p161 = scmp.ne.s32.totalorder %s147, %s148
      %p162 = scmp.eq.s32.totalorder %s24, 1
      %p163 = por %p161, %p162
      %p165 = scmp.ne.s32.totalorder %s148, %s164
      %p166 = scmp.eq.s32.totalorder %s24, 0
      %p167 = por %p165, %p166
      %p168 = scmp.le.s32.totalorder 1, %s18
      %p169 = scmp.lt.s32.totalorder %s18, 3
      %p170 = pnand %p168, %p169
      %p171 = pneg %p170
      // Predicated region
      $region9: #{tpu_custom_call.1} parent=5 // pred_check
        _
      $region10: #{tpu_custom_call.1} parent=5 // pred_check_branch
        %173 = sbr.rel (%p170) target = $region12
      $region11: #{tpu_custom_call.1} parent=5 // pred_region
        %s174 = ssub.s32 %s18, 1
        // Predicated region
        $region13: #{tpu_custom_call.1} parent=11 // pred_check
          %p175 = pneg %p56
        $region14: #{tpu_custom_call.1} parent=11 // pred_check_branch
          %177 = sbr.rel (%p175) target = $region16
        $region15: #{tpu_custom_call.1} parent=11 // pred_region
          %s178 = smul.u32 2, %s27
          %180 = vsyncadd [#allocation4], 0
          %s181 = smul.addr %s178, 4
          %s182 = scalar_lea.hbm %s0, %s181
          %s183 = sshll.u32 %s182, 4
          %s184 = int_to_ptr.hbm [resolvable:$true] %s183
          %s185 = sshll.u32 [#allocation3], 4
          %s186 = int_to_ptr.vmem [resolvable:$true] %s185
          %191 = dma.hbm_to_vmem [thread:$0]  %s184, 128, %s186, [#allocation4], 64, 64, 4
        $region16: #{tpu_custom_call.1} parent=11 // pred_fallthru
          _
      $region12: #{tpu_custom_call.1} parent=5 // pred_fallthru
        _
      %p192 = scmp.lt.s32.totalorder %s18, 2
      // Predicated region
      $region17: #{tpu_custom_call.1} parent=5 // pred_check
        %p193 = pneg %p192
      $region18: #{tpu_custom_call.1} parent=5 // pred_check_branch
        %195 = sbr.rel (%p193) target = $region20
      $region19: #{tpu_custom_call.1} parent=5 // pred_region
        // Predicated region
        $region21: #{tpu_custom_call.1} parent=19 // pred_check
          %p196 = pneg %p76
        $region22: #{tpu_custom_call.1} parent=19 // pred_check_branch
          %198 = sbr.rel (%p196) target = $region24
        $region23: #{tpu_custom_call.1} parent=19 // pred_region
          %s199 = sand.u32 %s18, 1
          %s200 = scalar_lea.sflag [#allocation7], %s199
          %s201 = sand.u32 %s66, 1
          %s202 = smul.addr %s201, 256
          %s203 = scalar_lea.vmem [#allocation6], %s202
          %s204 = smul.u32 4, %s26
          %206 = vsyncadd %s200, 0
          %s207 = smul.addr %s204, 4
          %s208 = scalar_lea.hbm %s1, %s207
          %s209 = sshll.u32 %s208, 4
          %s210 = int_to_ptr.hbm [resolvable:$true] %s209
          %s211 = sshll.u32 %s203, 4
          %s212 = int_to_ptr.vmem [resolvable:$true] %s211
          %217 = dma.hbm_to_vmem [thread:$0]  %s210, 4096, %s212, %s200, 512, 256, 16
        $region24: #{tpu_custom_call.1} parent=19 // pred_fallthru
          _
        // Predicated region
        $region25: #{tpu_custom_call.1} parent=19 // pred_check
          %p218 = pneg %p102
        $region26: #{tpu_custom_call.1} parent=19 // pred_check_branch
          %220 = sbr.rel (%p218) target = $region28
        $region27: #{tpu_custom_call.1} parent=19 // pred_region
          %s221 = sand.u32 %s18, 1
          %s222 = scalar_lea.sflag [#allocation7], %s221
          %s223 = sand.u32 %s92, 1
          %s224 = smul.addr %s223, 256
          %s225 = scalar_lea.vmem [#allocation8], %s224
          %s226 = smul.u32 4, %s26
          %228 = vsyncadd %s222, 0
          %s229 = smul.addr %s226, 4
          %s230 = scalar_lea.hbm %s2, %s229
          %s231 = sshll.u32 %s230, 4
          %s232 = int_to_ptr.hbm [resolvable:$true] %s231
          %s233 = sshll.u32 %s225, 4
          %s234 = int_to_ptr.vmem [resolvable:$true] %s233
          %239 = dma.hbm_to_vmem [thread:$0]  %s232, 4096, %s234, %s222, 512, 256, 16
        $region28: #{tpu_custom_call.1} parent=19 // pred_fallthru
          _
        // Predicated region
        $region29: #{tpu_custom_call.1} parent=19 // pred_check
          %p240 = pneg %p128
        $region30: #{tpu_custom_call.1} parent=19 // pred_check_branch
          %242 = sbr.rel (%p240) target = $region32
        $region31: #{tpu_custom_call.1} parent=19 // pred_region
          %s243 = sand.u32 %s118, 1
          %s244 = scalar_lea.sflag [#allocation10], %s243
          %s245 = sand.u32 %s118, 1
          %s246 = smul.addr %s245, 256
          %s247 = scalar_lea.vmem [#allocation9], %s246
          %s248 = smul.u32 64, %s26
          %250 = vsyncadd %s244, 0
          %s251 = smul.addr %s248, 4
          %s252 = scalar_lea.hbm %s3, %s251
          %s253 = sshll.u32 %s252, 4
          %s254 = int_to_ptr.hbm [resolvable:$true] %s253
          %s255 = sshll.u32 %s247, 4
          %s256 = int_to_ptr.vmem [resolvable:$true] %s255
          %261 = dma.hbm_to_vmem [thread:$0]  %s254, 4096, %s256, %s244, 64, 64, 4
        $region32: #{tpu_custom_call.1} parent=19 // pred_fallthru
          _
      $region20: #{tpu_custom_call.1} parent=5 // pred_fallthru
        _
      %p262 = scmp.le.s32.totalorder 1, %s18
      %p263 = scmp.lt.s32.totalorder %s18, 3
      %p264 = pnand %p262, %p263
      %p265 = pneg %p264
      // Predicated region
      $region33: #{tpu_custom_call.1} parent=5 // pred_check
        _
      $region34: #{tpu_custom_call.1} parent=5 // pred_check_branch
        %267 = sbr.rel (%p264) target = $region36
      $region35: #{tpu_custom_call.1} parent=5 // pred_region
        %s268 = ssub.s32 %s18, 1
        // Predicated region
        $region37: #{tpu_custom_call.1} parent=35 // pred_check
          %p269 = pneg %p56
        $region38: #{tpu_custom_call.1} parent=35 // pred_check_branch
          %271 = sbr.rel (%p269) target = $region40
        $region39: #{tpu_custom_call.1} parent=35 // pred_region
          %273 = dma.done [#allocation4], 128
        $region40: #{tpu_custom_call.1} parent=35 // pred_fallthru
          _
        %s274 = sand.u32 %s23, 1
        %s275 = scalar_lea.sflag [#allocation7], %s274
        %s276 = sand.u32 %s69, 1
        %s277 = smul.addr %s276, 256
        %s278 = scalar_lea.vmem [#allocation6], %s277
        // Predicated region
        $region41: #{tpu_custom_call.1} parent=35 // pred_check
          %p279 = pneg %p82
        $region42: #{tpu_custom_call.1} parent=35 // pred_check_branch
          %281 = sbr.rel (%p279) target = $region44
        $region43: #{tpu_custom_call.1} parent=35 // pred_region
          %283 = dma.done %s275, 4096
        $region44: #{tpu_custom_call.1} parent=35 // pred_fallthru
          _
        %s284 = sand.u32 %s23, 1
        %s285 = scalar_lea.sflag [#allocation7], %s284
        %s286 = sand.u32 %s95, 1
        %s287 = smul.addr %s286, 256
        %s288 = scalar_lea.vmem [#allocation8], %s287
        // Predicated region
        $region45: #{tpu_custom_call.1} parent=35 // pred_check
          %p289 = pneg %p108
        $region46: #{tpu_custom_call.1} parent=35 // pred_check_branch
          %291 = sbr.rel (%p289) target = $region48
        $region47: #{tpu_custom_call.1} parent=35 // pred_region
          %293 = dma.done %s285, 4096
        $region48: #{tpu_custom_call.1} parent=35 // pred_fallthru
          _
        %s294 = sand.u32 %s121, 1
        %s295 = scalar_lea.sflag [#allocation10], %s294
        %s296 = sand.u32 %s121, 1
        %s297 = smul.addr %s296, 256
        %s298 = scalar_lea.vmem [#allocation9], %s297
        // Predicated region
        $region49: #{tpu_custom_call.1} parent=35 // pred_check
          %p299 = pneg %p134
        $region50: #{tpu_custom_call.1} parent=35 // pred_check_branch
          %301 = sbr.rel (%p299) target = $region52
        $region51: #{tpu_custom_call.1} parent=35 // pred_region
          %303 = dma.done %s295, 4096
        $region52: #{tpu_custom_call.1} parent=35 // pred_fallthru
          _
        %p304 = pneg %p56
        %p305 = pneg %p53
        %s306 = sand.u32 %s23, 1
        %s307 = scalar_lea.sflag [#allocation7], %s306
        %s308 = sand.u32 %s69, 1
        %s309 = smul.addr %s308, 256
        %s310 = scalar_lea.vmem [#allocation6], %s309
        %p311 = pneg %p82
        %p312 = pneg %p79
        %s313 = sand.u32 %s23, 1
        %s314 = scalar_lea.sflag [#allocation7], %s313
        %s315 = sand.u32 %s95, 1
        %s316 = smul.addr %s315, 256
        %s317 = scalar_lea.vmem [#allocation8], %s316
        %p318 = pneg %p108
        %p319 = pneg %p105
        %s320 = sand.u32 %s121, 1
        %s321 = scalar_lea.sflag [#allocation10], %s320
        %s322 = sand.u32 %s121, 1
        %s323 = smul.addr %s322, 256
        %s324 = scalar_lea.vmem [#allocation9], %s323
        %p325 = pneg %p134
        %p326 = pneg %p131
        %p327 = pneg %p160
        %p328 = pneg %p157
        %s329 = smul.u32 2, %s27
        %s330 = smul.u32 4, %s28
        %s331 = smul.u32 4, %s28
        %s332 = smul.u32 64, %s28
        %s333 = smul.u32 2, %s27
        %p334 = scmp.eq.s32.totalorder %s28, 0
        // Predicated region
        $region53: #{tpu_custom_call.1} parent=35 // pred_check
          %p335 = pneg %p334
        $region54: #{tpu_custom_call.1} parent=35 // pred_check_branch
          %337 = sbr.rel (%p335) target = $region56
        $region55: #{tpu_custom_call.1} parent=35 // pred_region
          %338 = vst [vmem:[#allocation2] sm:$0xff] 0.0
          %339 = vst [vmem:[#allocation2 + $0x8] sm:$0xff] 0.0
        $region56: #{tpu_custom_call.1} parent=35 // pred_fallthru
          _
        %v340 = vld [vmem:[#allocation3] sm:$0xf]
        %v341 = vld [vmem:[#allocation3 + $0x4] sm:$0xf]
        %v342 = vld [vmem:[%s278] sm:$0xff]
        %v343 = vld [vmem:[%s278 + $0x8] sm:$0xff]
        %v344 = vld [vmem:[%s278 + $0x10] sm:$0xff]
        %v345 = vld [vmem:[%s278 + $0x18] sm:$0xff]
        %v346 = vld [vmem:[%s278 + $0x20] sm:$0xff]
        %v347 = vld [vmem:[%s278 + $0x28] sm:$0xff]
        %v348 = vld [vmem:[%s278 + $0x30] sm:$0xff]
        %v349 = vld [vmem:[%s278 + $0x38] sm:$0xff]
        %v350 = vld [vmem:[%s278 + $0x40] sm:$0xff]
        %v351 = vld [vmem:[%s278 + $0x48] sm:$0xff]
        %v352 = vld [vmem:[%s278 + $0x50] sm:$0xff]
        %v353 = vld [vmem:[%s278 + $0x58] sm:$0xff]
        %v354 = vld [vmem:[%s278 + $0x60] sm:$0xff]
        %v355 = vld [vmem:[%s278 + $0x68] sm:$0xff]
        %v356 = vld [vmem:[%s278 + $0x70] sm:$0xff]
        %v357 = vld [vmem:[%s278 + $0x78] sm:$0xff]
        %v358 = vld [vmem:[%s278 + $0x80] sm:$0xff]
        %v359 = vld [vmem:[%s278 + $0x88] sm:$0xff]
        %v360 = vld [vmem:[%s278 + $0x90] sm:$0xff]
        %v361 = vld [vmem:[%s278 + $0x98] sm:$0xff]
        %v362 = vld [vmem:[%s278 + $0xa0] sm:$0xff]
        %v363 = vld [vmem:[%s278 + $0xa8] sm:$0xff]
        %v364 = vld [vmem:[%s278 + $0xb0] sm:$0xff]
        %v365 = vld [vmem:[%s278 + $0xb8] sm:$0xff]
        %v366 = vld [vmem:[%s278 + $0xc0] sm:$0xff]
        %v367 = vld [vmem:[%s278 + $0xc8] sm:$0xff]
        %v368 = vld [vmem:[%s278 + $0xd0] sm:$0xff]
        %v369 = vld [vmem:[%s278 + $0xd8] sm:$0xff]
        %v370 = vld [vmem:[%s278 + $0xe0] sm:$0xff]
        %v371 = vld [vmem:[%s278 + $0xe8] sm:$0xff]
        %v372 = vld [vmem:[%s278 + $0xf0] sm:$0xff]
        %v373 = vld [vmem:[%s278 + $0xf8] sm:$0xff]
        %v376 = vunpack.c.l.b16 %v340
        %v377 = vunpack.c.l.b16 %v341
        %v378 = vpack.c.b16 %v377, %v376
        %v412 = vunpack.c.l.b16 %v342
        %v413 = vunpack.c.h.b16 %v342
        %v414 = vunpack.c.l.b16 %v343
        %v415 = vunpack.c.h.b16 %v343
        %v416 = vunpack.c.l.b16 %v344
        %v417 = vunpack.c.h.b16 %v344
        %v418 = vunpack.c.l.b16 %v345
        %v419 = vunpack.c.h.b16 %v345
        %v420 = vunpack.c.l.b16 %v346
        %v421 = vunpack.c.h.b16 %v346
        %v422 = vunpack.c.l.b16 %v347
        %v423 = vunpack.c.h.b16 %v347
        %v424 = vunpack.c.l.b16 %v348
        %v425 = vunpack.c.h.b16 %v348
        %v426 = vunpack.c.l.b16 %v349
        %v427 = vunpack.c.h.b16 %v349
        %v428 = vunpack.c.l.b16 %v350
        %v429 = vunpack.c.h.b16 %v350
        %v430 = vunpack.c.l.b16 %v351
        %v431 = vunpack.c.h.b16 %v351
        %v432 = vunpack.c.l.b16 %v352
        %v433 = vunpack.c.h.b16 %v352
        %v434 = vunpack.c.l.b16 %v353
        %v435 = vunpack.c.h.b16 %v353
        %v436 = vunpack.c.l.b16 %v354
        %v437 = vunpack.c.h.b16 %v354
        %v438 = vunpack.c.l.b16 %v355
        %v439 = vunpack.c.h.b16 %v355
        %v440 = vunpack.c.l.b16 %v356
        %v441 = vunpack.c.h.b16 %v356
        %v442 = vunpack.c.l.b16 %v357
        %v443 = vunpack.c.h.b16 %v357
        %v444 = vunpack.c.l.b16 %v358
        %v445 = vunpack.c.h.b16 %v358
        %v446 = vunpack.c.l.b16 %v359
        %v447 = vunpack.c.h.b16 %v359
        %v448 = vunpack.c.l.b16 %v360
        %v449 = vunpack.c.h.b16 %v360
        %v450 = vunpack.c.l.b16 %v361
        %v451 = vunpack.c.h.b16 %v361
        %v452 = vunpack.c.l.b16 %v362
        %v453 = vunpack.c.h.b16 %v362
        %v454 = vunpack.c.l.b16 %v363
        %v455 = vunpack.c.h.b16 %v363
        %v456 = vunpack.c.l.b16 %v364
        %v457 = vunpack.c.h.b16 %v364
        %v458 = vunpack.c.l.b16 %v365
        %v459 = vunpack.c.h.b16 %v365
        %v460 = vunpack.c.l.b16 %v366
        %v461 = vunpack.c.h.b16 %v366
        %v462 = vunpack.c.l.b16 %v367
        %v463 = vunpack.c.h.b16 %v367
        %v464 = vunpack.c.l.b16 %v368
        %v465 = vunpack.c.h.b16 %v368
        %v466 = vunpack.c.l.b16 %v369
        %v467 = vunpack.c.h.b16 %v369
        %v468 = vunpack.c.l.b16 %v370
        %v469 = vunpack.c.h.b16 %v370
        %v470 = vunpack.c.l.b16 %v371
        %v471 = vunpack.c.h.b16 %v371
        %v472 = vunpack.c.l.b16 %v372
        %v473 = vunpack.c.h.b16 %v372
        %v474 = vunpack.c.l.b16 %v373
        %v475 = vunpack.c.h.b16 %v373
        %v476 = vpack.c.b16 %v416, %v412
        %v477 = vpack.c.b16 %v417, %v413
        %v478 = vpack.c.b16 %v418, %v414
        %v479 = vpack.c.b16 %v419, %v415
        %v480 = vpack.c.b16 %v424, %v420
        %v481 = vpack.c.b16 %v425, %v421
        %v482 = vpack.c.b16 %v426, %v422
        %v483 = vpack.c.b16 %v427, %v423
        %v484 = vpack.c.b16 %v432, %v428
        %v485 = vpack.c.b16 %v433, %v429
        %v486 = vpack.c.b16 %v434, %v430
        %v487 = vpack.c.b16 %v435, %v431
        %v488 = vpack.c.b16 %v440, %v436
        %v489 = vpack.c.b16 %v441, %v437
        %v490 = vpack.c.b16 %v442, %v438
        %v491 = vpack.c.b16 %v443, %v439
        %v492 = vpack.c.b16 %v448, %v444
        %v493 = vpack.c.b16 %v449, %v445
        %v494 = vpack.c.b16 %v450, %v446
        %v495 = vpack.c.b16 %v451, %v447
        %v496 = vpack.c.b16 %v456, %v452
        %v497 = vpack.c.b16 %v457, %v453
        %v498 = vpack.c.b16 %v458, %v454
        %v499 = vpack.c.b16 %v459, %v455
        %v500 = vpack.c.b16 %v464, %v460
        %v501 = vpack.c.b16 %v465, %v461
        %v502 = vpack.c.b16 %v466, %v462
        %v503 = vpack.c.b16 %v467, %v463
        %v504 = vpack.c.b16 %v472, %v468
        %v505 = vpack.c.b16 %v473, %v469
        %v506 = vpack.c.b16 %v474, %v470
        %v507 = vpack.c.b16 %v475, %v471
        %540 = vmatpush.bf16.msra.mxu0 %v504
        %541 = vmatpush.bf16.msra.mxu0 %v500
        %542 = vmatpush.bf16.msra.mxu0 %v496
        %543 = vmatpush.bf16.msra.mxu0 %v492
        %544 = vmatpush.bf16.msra.mxu0 %v488
        %545 = vmatpush.bf16.msra.mxu0 %v484
        %546 = vmatpush.bf16.msra.mxu0 %v480
        %547 = vmatpush.bf16.msra.mxu0 %v476
        %548 = vmatmul.bf16.gmra.mxu0 %v378
        %v549 = vpop.f32.mrf.mxu0
        %v550 = vadd.f32 0.0, %v549
        %v551 = vpop.f32.mrf.mxu0
        %v552 = vadd.f32 0.0, %v551
        %553 = vdwg.mxu0
        %554 = vmatpush.bf16.msra.mxu0 %v505
        %555 = vmatpush.bf16.msra.mxu0 %v501
        %556 = vmatpush.bf16.msra.mxu0 %v497
        %557 = vmatpush.bf16.msra.mxu0 %v493
        %558 = vmatpush.bf16.msra.mxu0 %v489
        %559 = vmatpush.bf16.msra.mxu0 %v485
        %560 = vmatpush.bf16.msra.mxu0 %v481
        %561 = vmatpush.bf16.msra.mxu0 %v477
        %562 = vmatmul.bf16.gmra.mxu0 %v378
        %v563 = vpop.f32.mrf.mxu0
        %v564 = vadd.f32 0.0, %v563
        %v565 = vpop.f32.mrf.mxu0
        %v566 = vadd.f32 0.0, %v565
        %567 = vdwg.mxu0
        %568 = vmatpush.bf16.msra.mxu0 %v506
        %569 = vmatpush.bf16.msra.mxu0 %v502
        %570 = vmatpush.bf16.msra.mxu0 %v498
        %571 = vmatpush.bf16.msra.mxu0 %v494
        %572 = vmatpush.bf16.msra.mxu0 %v490
        %573 = vmatpush.bf16.msra.mxu0 %v486
        %574 = vmatpush.bf16.msra.mxu0 %v482
        %575 = vmatpush.bf16.msra.mxu0 %v478
        %576 = vmatmul.bf16.gmra.mxu0 %v378
        %v577 = vpop.f32.mrf.mxu0
        %v578 = vadd.f32 0.0, %v577
        %v579 = vpop.f32.mrf.mxu0
        %v580 = vadd.f32 0.0, %v579
        %581 = vdwg.mxu0
        %582 = vmatpush.bf16.msra.mxu0 %v507
        %583 = vmatpush.bf16.msra.mxu0 %v503
        %584 = vmatpush.bf16.msra.mxu0 %v499
        %585 = vmatpush.bf16.msra.mxu0 %v495
        %586 = vmatpush.bf16.msra.mxu0 %v491
        %587 = vmatpush.bf16.msra.mxu0 %v487
        %588 = vmatpush.bf16.msra.mxu0 %v483
        %589 = vmatpush.bf16.msra.mxu0 %v479
        %590 = vmatmul.bf16.gmra.mxu0 %v378
        %v591 = vpop.f32.mrf.mxu0
        %v592 = vadd.f32 0.0, %v591
        %v593 = vpop.f32.mrf.mxu0
        %v594 = vadd.f32 0.0, %v593
        %595 = vdwg.mxu0
        %v596 = vld [vmem:[%s288] sm:$0xff]
        %v597 = vld [vmem:[%s288 + $0x8] sm:$0xff]
        %v598 = vld [vmem:[%s288 + $0x10] sm:$0xff]
        %v599 = vld [vmem:[%s288 + $0x18] sm:$0xff]
        %v600 = vld [vmem:[%s288 + $0x20] sm:$0xff]
        %v601 = vld [vmem:[%s288 + $0x28] sm:$0xff]
        %v602 = vld [vmem:[%s288 + $0x30] sm:$0xff]
        %v603 = vld [vmem:[%s288 + $0x38] sm:$0xff]
        %v604 = vld [vmem:[%s288 + $0x40] sm:$0xff]
        %v605 = vld [vmem:[%s288 + $0x48] sm:$0xff]
        %v606 = vld [vmem:[%s288 + $0x50] sm:$0xff]
        %v607 = vld [vmem:[%s288 + $0x58] sm:$0xff]
        %v608 = vld [vmem:[%s288 + $0x60] sm:$0xff]
        %v609 = vld [vmem:[%s288 + $0x68] sm:$0xff]
        %v610 = vld [vmem:[%s288 + $0x70] sm:$0xff]
        %v611 = vld [vmem:[%s288 + $0x78] sm:$0xff]
        %v612 = vld [vmem:[%s288 + $0x80] sm:$0xff]
        %v613 = vld [vmem:[%s288 + $0x88] sm:$0xff]
        %v614 = vld [vmem:[%s288 + $0x90] sm:$0xff]
        %v615 = vld [vmem:[%s288 + $0x98] sm:$0xff]
        %v616 = vld [vmem:[%s288 + $0xa0] sm:$0xff]
        %v617 = vld [vmem:[%s288 + $0xa8] sm:$0xff]
        %v618 = vld [vmem:[%s288 + $0xb0] sm:$0xff]
        %v619 = vld [vmem:[%s288 + $0xb8] sm:$0xff]
        %v620 = vld [vmem:[%s288 + $0xc0] sm:$0xff]
        %v621 = vld [vmem:[%s288 + $0xc8] sm:$0xff]
        %v622 = vld [vmem:[%s288 + $0xd0] sm:$0xff]
        %v623 = vld [vmem:[%s288 + $0xd8] sm:$0xff]
        %v624 = vld [vmem:[%s288 + $0xe0] sm:$0xff]
        %v625 = vld [vmem:[%s288 + $0xe8] sm:$0xff]
        %v626 = vld [vmem:[%s288 + $0xf0] sm:$0xff]
        %v627 = vld [vmem:[%s288 + $0xf8] sm:$0xff]
        %v660 = vunpack.c.l.b16 %v596
        %v661 = vunpack.c.h.b16 %v596
        %v662 = vunpack.c.l.b16 %v597
        %v663 = vunpack.c.h.b16 %v597
        %v664 = vunpack.c.l.b16 %v598
        %v665 = vunpack.c.h.b16 %v598
        %v666 = vunpack.c.l.b16 %v599
        %v667 = vunpack.c.h.b16 %v599
        %v668 = vunpack.c.l.b16 %v600
        %v669 = vunpack.c.h.b16 %v600
        %v670 = vunpack.c.l.b16 %v601
        %v671 = vunpack.c.h.b16 %v601
        %v672 = vunpack.c.l.b16 %v602
        %v673 = vunpack.c.h.b16 %v602
        %v674 = vunpack.c.l.b16 %v603
        %v675 = vunpack.c.h.b16 %v603
        %v676 = vunpack.c.l.b16 %v604
        %v677 = vunpack.c.h.b16 %v604
        %v678 = vunpack.c.l.b16 %v605
        %v679 = vunpack.c.h.b16 %v605
        %v680 = vunpack.c.l.b16 %v606
        %v681 = vunpack.c.h.b16 %v606
        %v682 = vunpack.c.l.b16 %v607
        %v683 = vunpack.c.h.b16 %v607
        %v684 = vunpack.c.l.b16 %v608
        %v685 = vunpack.c.h.b16 %v608
        %v686 = vunpack.c.l.b16 %v609
        %v687 = vunpack.c.h.b16 %v609
        %v688 = vunpack.c.l.b16 %v610
        %v689 = vunpack.c.h.b16 %v610
        %v690 = vunpack.c.l.b16 %v611
        %v691 = vunpack.c.h.b16 %v611
        %v692 = vunpack.c.l.b16 %v612
        %v693 = vunpack.c.h.b16 %v612
        %v694 = vunpack.c.l.b16 %v613
        %v695 = vunpack.c.h.b16 %v613
        %v696 = vunpack.c.l.b16 %v614
        %v697 = vunpack.c.h.b16 %v614
        %v698 = vunpack.c.l.b16 %v615
        %v699 = vunpack.c.h.b16 %v615
        %v700 = vunpack.c.l.b16 %v616
        %v701 = vunpack.c.h.b16 %v616
        %v702 = vunpack.c.l.b16 %v617
        %v703 = vunpack.c.h.b16 %v617
        %v704 = vunpack.c.l.b16 %v618
        %v705 = vunpack.c.h.b16 %v618
        %v706 = vunpack.c.l.b16 %v619
        %v707 = vunpack.c.h.b16 %v619
        %v708 = vunpack.c.l.b16 %v620
        %v709 = vunpack.c.h.b16 %v620
        %v710 = vunpack.c.l.b16 %v621
        %v711 = vunpack.c.h.b16 %v621
        %v712 = vunpack.c.l.b16 %v622
        %v713 = vunpack.c.h.b16 %v622
        %v714 = vunpack.c.l.b16 %v623
        %v715 = vunpack.c.h.b16 %v623
        %v716 = vunpack.c.l.b16 %v624
        %v717 = vunpack.c.h.b16 %v624
        %v718 = vunpack.c.l.b16 %v625
        %v719 = vunpack.c.h.b16 %v625
        %v720 = vunpack.c.l.b16 %v626
        %v721 = vunpack.c.h.b16 %v626
        %v722 = vunpack.c.l.b16 %v627
        %v723 = vunpack.c.h.b16 %v627
        %v724 = vpack.c.b16 %v664, %v660
        %v725 = vpack.c.b16 %v665, %v661
        %v726 = vpack.c.b16 %v666, %v662
        %v727 = vpack.c.b16 %v667, %v663
        %v728 = vpack.c.b16 %v672, %v668
        %v729 = vpack.c.b16 %v673, %v669
        %v730 = vpack.c.b16 %v674, %v670
        %v731 = vpack.c.b16 %v675, %v671
        %v732 = vpack.c.b16 %v680, %v676
        %v733 = vpack.c.b16 %v681, %v677
        %v734 = vpack.c.b16 %v682, %v678
        %v735 = vpack.c.b16 %v683, %v679
        %v736 = vpack.c.b16 %v688, %v684
        %v737 = vpack.c.b16 %v689, %v685
        %v738 = vpack.c.b16 %v690, %v686
        %v739 = vpack.c.b16 %v691, %v687
        %v740 = vpack.c.b16 %v696, %v692
        %v741 = vpack.c.b16 %v697, %v693
        %v742 = vpack.c.b16 %v698, %v694
        %v743 = vpack.c.b16 %v699, %v695
        %v744 = vpack.c.b16 %v704, %v700
        %v745 = vpack.c.b16 %v705, %v701
        %v746 = vpack.c.b16 %v706, %v702
        %v747 = vpack.c.b16 %v707, %v703
        %v748 = vpack.c.b16 %v712, %v708
        %v749 = vpack.c.b16 %v713, %v709
        %v750 = vpack.c.b16 %v714, %v710
        %v751 = vpack.c.b16 %v715, %v711
        %v752 = vpack.c.b16 %v720, %v716
        %v753 = vpack.c.b16 %v721, %v717
        %v754 = vpack.c.b16 %v722, %v718
        %v755 = vpack.c.b16 %v723, %v719
        %788 = vmatpush.bf16.msra.mxu0 %v752
        %789 = vmatpush.bf16.msra.mxu0 %v748
        %790 = vmatpush.bf16.msra.mxu0 %v744
        %791 = vmatpush.bf16.msra.mxu0 %v740
        %792 = vmatpush.bf16.msra.mxu0 %v736
        %793 = vmatpush.bf16.msra.mxu0 %v732
        %794 = vmatpush.bf16.msra.mxu0 %v728
        %795 = vmatpush.bf16.msra.mxu0 %v724
        %796 = vmatmul.bf16.gmra.mxu0 %v378
        %v797 = vpop.f32.mrf.mxu0
        %v798 = vadd.f32 0.0, %v797
        %v799 = vpop.f32.mrf.mxu0
        %v800 = vadd.f32 0.0, %v799
        %801 = vdwg.mxu0
        %802 = vmatpush.bf16.msra.mxu0 %v753
        %803 = vmatpush.bf16.msra.mxu0 %v749
        %804 = vmatpush.bf16.msra.mxu0 %v745
        %805 = vmatpush.bf16.msra.mxu0 %v741
        %806 = vmatpush.bf16.msra.mxu0 %v737
        %807 = vmatpush.bf16.msra.mxu0 %v733
        %808 = vmatpush.bf16.msra.mxu0 %v729
        %809 = vmatpush.bf16.msra.mxu0 %v725
        %810 = vmatmul.bf16.gmra.mxu0 %v378
        %v811 = vpop.f32.mrf.mxu0
        %v812 = vadd.f32 0.0, %v811
        %v813 = vpop.f32.mrf.mxu0
        %v814 = vadd.f32 0.0, %v813
        %815 = vdwg.mxu0
        %816 = vmatpush.bf16.msra.mxu0 %v754
        %817 = vmatpush.bf16.msra.mxu0 %v750
        %818 = vmatpush.bf16.msra.mxu0 %v746
        %819 = vmatpush.bf16.msra.mxu0 %v742
        %820 = vmatpush.bf16.msra.mxu0 %v738
        %821 = vmatpush.bf16.msra.mxu0 %v734
        %822 = vmatpush.bf16.msra.mxu0 %v730
        %823 = vmatpush.bf16.msra.mxu0 %v726
        %824 = vmatmul.bf16.gmra.mxu0 %v378
        %v825 = vpop.f32.mrf.mxu0
        %v826 = vadd.f32 0.0, %v825
        %v827 = vpop.f32.mrf.mxu0
        %v828 = vadd.f32 0.0, %v827
        %829 = vdwg.mxu0
        %830 = vmatpush.bf16.msra.mxu0 %v755
        %831 = vmatpush.bf16.msra.mxu0 %v751
        %832 = vmatpush.bf16.msra.mxu0 %v747
        %833 = vmatpush.bf16.msra.mxu0 %v743
        %834 = vmatpush.bf16.msra.mxu0 %v739
        %835 = vmatpush.bf16.msra.mxu0 %v735
        %836 = vmatpush.bf16.msra.mxu0 %v731
        %837 = vmatpush.bf16.msra.mxu0 %v727
        %838 = vmatmul.bf16.gmra.mxu0 %v378
        %v839 = vpop.f32.mrf.mxu0
        %v840 = vadd.f32 0.0, %v839
        %v841 = vpop.f32.mrf.mxu0
        %v842 = vadd.f32 0.0, %v841
        %843 = vdwg.mxu0
        %v844 = vsub.f32 0.0, %v550
        %v845 = vsub.f32 0.0, %v564
        %v846 = vsub.f32 0.0, %v578
        %v847 = vsub.f32 0.0, %v592
        %v848 = vsub.f32 0.0, %v552
        %v849 = vsub.f32 0.0, %v566
        %v850 = vsub.f32 0.0, %v580
        %v851 = vsub.f32 0.0, %v594
        %v852 = vmul.f32 %v844, 1.442695
        %v853 = vpow.pop %v852
        %v854 = vmul.f32 %v845, 1.442695
        %v855 = vpow.pop %v854
        %v856 = vmul.f32 %v846, 1.442695
        %v857 = vpow.pop %v856
        %v858 = vmul.f32 %v847, 1.442695
        %v859 = vpow.pop %v858
        %v860 = vmul.f32 %v848, 1.442695
        %v861 = vpow.pop %v860
        %v862 = vmul.f32 %v849, 1.442695
        %v863 = vpow.pop %v862
        %v864 = vmul.f32 %v850, 1.442695
        %v865 = vpow.pop %v864
        %v866 = vmul.f32 %v851, 1.442695
        %v867 = vpow.pop %v866
        %v868 = vadd.f32 %v853, 1.0
        %v869 = vadd.f32 %v855, 1.0
        %v870 = vadd.f32 %v857, 1.0
        %v871 = vadd.f32 %v859, 1.0
        %v872 = vadd.f32 %v861, 1.0
        %v873 = vadd.f32 %v863, 1.0
        %v874 = vadd.f32 %v865, 1.0
        %v875 = vadd.f32 %v867, 1.0
        %v876 = vrcp.pop %v868
        %v877 = vrcp.pop %v869
        %v878 = vrcp.pop %v870
        %v879 = vrcp.pop %v871
        %v880 = vrcp.pop %v872
        %v881 = vrcp.pop %v873
        %v882 = vrcp.pop %v874
        %v883 = vrcp.pop %v875
        %v884 = vmul.f32 %v550, %v876
        %v885 = vmul.f32 %v564, %v877
        %v886 = vmul.f32 %v578, %v878
        %v887 = vmul.f32 %v592, %v879
        %v888 = vmul.f32 %v552, %v880
        %v889 = vmul.f32 %v566, %v881
        %v890 = vmul.f32 %v580, %v882
        %v891 = vmul.f32 %v594, %v883
        %v892 = vmul.f32 %v884, %v798
        %v893 = vmul.f32 %v885, %v812
        %v894 = vmul.f32 %v886, %v826
        %v895 = vmul.f32 %v887, %v840
        %v896 = vmul.f32 %v888, %v800
        %v897 = vmul.f32 %v889, %v814
        %v898 = vmul.f32 %v890, %v828
        %v899 = vmul.f32 %v891, %v842
        %v900 = vpack.c.bf16 %v896, %v892
        %v901 = vpack.c.bf16 %v897, %v893
        %v902 = vpack.c.bf16 %v898, %v894
        %v903 = vpack.c.bf16 %v899, %v895
        %v904 = vld [vmem:[#allocation2] sm:$0xff]
        %v905 = vld [vmem:[#allocation2 + $0x8] sm:$0xff]
        %v906 = vld [vmem:[%s298] sm:$0xf]
        %v907 = vld [vmem:[%s298 + $0x4] sm:$0xf]
        %v908 = vld [vmem:[%s298 + $0x8] sm:$0xf]
        %v909 = vld [vmem:[%s298 + $0xc] sm:$0xf]
        %v910 = vld [vmem:[%s298 + $0x10] sm:$0xf]
        %v911 = vld [vmem:[%s298 + $0x14] sm:$0xf]
        %v912 = vld [vmem:[%s298 + $0x18] sm:$0xf]
        %v913 = vld [vmem:[%s298 + $0x1c] sm:$0xf]
        %v914 = vld [vmem:[%s298 + $0x20] sm:$0xf]
        %v915 = vld [vmem:[%s298 + $0x24] sm:$0xf]
        %v916 = vld [vmem:[%s298 + $0x28] sm:$0xf]
        %v917 = vld [vmem:[%s298 + $0x2c] sm:$0xf]
        %v918 = vld [vmem:[%s298 + $0x30] sm:$0xf]
        %v919 = vld [vmem:[%s298 + $0x34] sm:$0xf]
        %v920 = vld [vmem:[%s298 + $0x38] sm:$0xf]
        %v921 = vld [vmem:[%s298 + $0x3c] sm:$0xf]
        %v922 = vld [vmem:[%s298 + $0x40] sm:$0xf]
        %v923 = vld [vmem:[%s298 + $0x44] sm:$0xf]
        %v924 = vld [vmem:[%s298 + $0x48] sm:$0xf]
        %v925 = vld [vmem:[%s298 + $0x4c] sm:$0xf]
        %v926 = vld [vmem:[%s298 + $0x50] sm:$0xf]
        %v927 = vld [vmem:[%s298 + $0x54] sm:$0xf]
        %v928 = vld [vmem:[%s298 + $0x58] sm:$0xf]
        %v929 = vld [vmem:[%s298 + $0x5c] sm:$0xf]
        %v930 = vld [vmem:[%s298 + $0x60] sm:$0xf]
        %v931 = vld [vmem:[%s298 + $0x64] sm:$0xf]
        %v932 = vld [vmem:[%s298 + $0x68] sm:$0xf]
        %v933 = vld [vmem:[%s298 + $0x6c] sm:$0xf]
        %v934 = vld [vmem:[%s298 + $0x70] sm:$0xf]
        %v935 = vld [vmem:[%s298 + $0x74] sm:$0xf]
        %v936 = vld [vmem:[%s298 + $0x78] sm:$0xf]
        %v937 = vld [vmem:[%s298 + $0x7c] sm:$0xf]
        %v938 = vld [vmem:[%s298 + $0x80] sm:$0xf]
        %v939 = vld [vmem:[%s298 + $0x84] sm:$0xf]
        %v940 = vld [vmem:[%s298 + $0x88] sm:$0xf]
        %v941 = vld [vmem:[%s298 + $0x8c] sm:$0xf]
        %v942 = vld [vmem:[%s298 + $0x90] sm:$0xf]
        %v943 = vld [vmem:[%s298 + $0x94] sm:$0xf]
        %v944 = vld [vmem:[%s298 + $0x98] sm:$0xf]
        %v945 = vld [vmem:[%s298 + $0x9c] sm:$0xf]
        %v946 = vld [vmem:[%s298 + $0xa0] sm:$0xf]
        %v947 = vld [vmem:[%s298 + $0xa4] sm:$0xf]
        %v948 = vld [vmem:[%s298 + $0xa8] sm:$0xf]
        %v949 = vld [vmem:[%s298 + $0xac] sm:$0xf]
        %v950 = vld [vmem:[%s298 + $0xb0] sm:$0xf]
        %v951 = vld [vmem:[%s298 + $0xb4] sm:$0xf]
        %v952 = vld [vmem:[%s298 + $0xb8] sm:$0xf]
        %v953 = vld [vmem:[%s298 + $0xbc] sm:$0xf]
        %v954 = vld [vmem:[%s298 + $0xc0] sm:$0xf]
        %v955 = vld [vmem:[%s298 + $0xc4] sm:$0xf]
        %v956 = vld [vmem:[%s298 + $0xc8] sm:$0xf]
        %v957 = vld [vmem:[%s298 + $0xcc] sm:$0xf]
        %v958 = vld [vmem:[%s298 + $0xd0] sm:$0xf]
        %v959 = vld [vmem:[%s298 + $0xd4] sm:$0xf]
        %v960 = vld [vmem:[%s298 + $0xd8] sm:$0xf]
        %v961 = vld [vmem:[%s298 + $0xdc] sm:$0xf]
        %v962 = vld [vmem:[%s298 + $0xe0] sm:$0xf]
        %v963 = vld [vmem:[%s298 + $0xe4] sm:$0xf]
        %v964 = vld [vmem:[%s298 + $0xe8] sm:$0xf]
        %v965 = vld [vmem:[%s298 + $0xec] sm:$0xf]
        %v966 = vld [vmem:[%s298 + $0xf0] sm:$0xf]
        %v967 = vld [vmem:[%s298 + $0xf4] sm:$0xf]
        %v968 = vld [vmem:[%s298 + $0xf8] sm:$0xf]
        %v969 = vld [vmem:[%s298 + $0xfc] sm:$0xf]
        %v1034 = vunpack.c.l.b16 %v906
        %v1035 = vunpack.c.l.b16 %v907
        %v1036 = vunpack.c.l.b16 %v908
        %v1037 = vunpack.c.l.b16 %v909
        %v1038 = vunpack.c.l.b16 %v910
        %v1039 = vunpack.c.l.b16 %v911
        %v1040 = vunpack.c.l.b16 %v912
        %v1041 = vunpack.c.l.b16 %v913
        %v1042 = vunpack.c.l.b16 %v914
        %v1043 = vunpack.c.l.b16 %v915
        %v1044 = vunpack.c.l.b16 %v916
        %v1045 = vunpack.c.l.b16 %v917
        %v1046 = vunpack.c.l.b16 %v918
        %v1047 = vunpack.c.l.b16 %v919
        %v1048 = vunpack.c.l.b16 %v920
        %v1049 = vunpack.c.l.b16 %v921
        %v1050 = vunpack.c.l.b16 %v922
        %v1051 = vunpack.c.l.b16 %v923
        %v1052 = vunpack.c.l.b16 %v924
        %v1053 = vunpack.c.l.b16 %v925
        %v1054 = vunpack.c.l.b16 %v926
        %v1055 = vunpack.c.l.b16 %v927
        %v1056 = vunpack.c.l.b16 %v928
        %v1057 = vunpack.c.l.b16 %v929
        %v1058 = vunpack.c.l.b16 %v930
        %v1059 = vunpack.c.l.b16 %v931
        %v1060 = vunpack.c.l.b16 %v932
        %v1061 = vunpack.c.l.b16 %v933
        %v1062 = vunpack.c.l.b16 %v934
        %v1063 = vunpack.c.l.b16 %v935
        %v1064 = vunpack.c.l.b16 %v936
        %v1065 = vunpack.c.l.b16 %v937
        %v1066 = vunpack.c.l.b16 %v938
        %v1067 = vunpack.c.l.b16 %v939
        %v1068 = vunpack.c.l.b16 %v940
        %v1069 = vunpack.c.l.b16 %v941
        %v1070 = vunpack.c.l.b16 %v942
        %v1071 = vunpack.c.l.b16 %v943
        %v1072 = vunpack.c.l.b16 %v944
        %v1073 = vunpack.c.l.b16 %v945
        %v1074 = vunpack.c.l.b16 %v946
        %v1075 = vunpack.c.l.b16 %v947
        %v1076 = vunpack.c.l.b16 %v948
        %v1077 = vunpack.c.l.b16 %v949
        %v1078 = vunpack.c.l.b16 %v950
        %v1079 = vunpack.c.l.b16 %v951
        %v1080 = vunpack.c.l.b16 %v952
        %v1081 = vunpack.c.l.b16 %v953
        %v1082 = vunpack.c.l.b16 %v954
        %v1083 = vunpack.c.l.b16 %v955
        %v1084 = vunpack.c.l.b16 %v956
        %v1085 = vunpack.c.l.b16 %v957
        %v1086 = vunpack.c.l.b16 %v958
        %v1087 = vunpack.c.l.b16 %v959
        %v1088 = vunpack.c.l.b16 %v960
        %v1089 = vunpack.c.l.b16 %v961
        %v1090 = vunpack.c.l.b16 %v962
        %v1091 = vunpack.c.l.b16 %v963
        %v1092 = vunpack.c.l.b16 %v964
        %v1093 = vunpack.c.l.b16 %v965
        %v1094 = vunpack.c.l.b16 %v966
        %v1095 = vunpack.c.l.b16 %v967
        %v1096 = vunpack.c.l.b16 %v968
        %v1097 = vunpack.c.l.b16 %v969
        %v1098 = vpack.c.b16 %v1035, %v1034
        %v1099 = vpack.c.b16 %v1037, %v1036
        %v1100 = vpack.c.b16 %v1039, %v1038
        %v1101 = vpack.c.b16 %v1041, %v1040
        %v1102 = vpack.c.b16 %v1043, %v1042
        %v1103 = vpack.c.b16 %v1045, %v1044
        %v1104 = vpack.c.b16 %v1047, %v1046
        %v1105 = vpack.c.b16 %v1049, %v1048
        %v1106 = vpack.c.b16 %v1051, %v1050
        %v1107 = vpack.c.b16 %v1053, %v1052
        %v1108 = vpack.c.b16 %v1055, %v1054
        %v1109 = vpack.c.b16 %v1057, %v1056
        %v1110 = vpack.c.b16 %v1059, %v1058
        %v1111 = vpack.c.b16 %v1061, %v1060
        %v1112 = vpack.c.b16 %v1063, %v1062
        %v1113 = vpack.c.b16 %v1065, %v1064
        %v1114 = vpack.c.b16 %v1067, %v1066
        %v1115 = vpack.c.b16 %v1069, %v1068
        %v1116 = vpack.c.b16 %v1071, %v1070
        %v1117 = vpack.c.b16 %v1073, %v1072
        %v1118 = vpack.c.b16 %v1075, %v1074
        %v1119 = vpack.c.b16 %v1077, %v1076
        %v1120 = vpack.c.b16 %v1079, %v1078
        %v1121 = vpack.c.b16 %v1081, %v1080
        %v1122 = vpack.c.b16 %v1083, %v1082
        %v1123 = vpack.c.b16 %v1085, %v1084
        %v1124 = vpack.c.b16 %v1087, %v1086
        %v1125 = vpack.c.b16 %v1089, %v1088
        %v1126 = vpack.c.b16 %v1091, %v1090
        %v1127 = vpack.c.b16 %v1093, %v1092
        %v1128 = vpack.c.b16 %v1095, %v1094
        %v1129 = vpack.c.b16 %v1097, %v1096
        %1162 = vmatpush.bf16.msra.mxu0 %v1105
        %1163 = vmatpush.bf16.msra.mxu0 %v1104
        %1164 = vmatpush.bf16.msra.mxu0 %v1103
        %1165 = vmatpush.bf16.msra.mxu0 %v1102
        %1166 = vmatpush.bf16.msra.mxu0 %v1101
        %1167 = vmatpush.bf16.msra.mxu0 %v1100
        %1168 = vmatpush.bf16.msra.mxu0 %v1099
        %1169 = vmatpush.bf16.msra.mxu0 %v1098
        %1170 = vmatmul.bf16.gmra.mxu0 %v900
        %v1171 = vpop.f32.mrf.mxu0
        %v1172 = vadd.f32 0.0, %v1171
        %v1173 = vpop.f32.mrf.mxu0
        %v1174 = vadd.f32 0.0, %v1173
        %1175 = vdwg.mxu0
        %1176 = vmatpush.bf16.msra.mxu0 %v1113
        %1177 = vmatpush.bf16.msra.mxu0 %v1112
        %1178 = vmatpush.bf16.msra.mxu0 %v1111
        %1179 = vmatpush.bf16.msra.mxu0 %v1110
        %1180 = vmatpush.bf16.msra.mxu0 %v1109
        %1181 = vmatpush.bf16.msra.mxu0 %v1108
        %1182 = vmatpush.bf16.msra.mxu0 %v1107
        %1183 = vmatpush.bf16.msra.mxu0 %v1106
        %1184 = vmatmul.bf16.gmra.mxu0 %v901
        %v1185 = vpop.f32.mrf.mxu0
        %v1186 = vadd.f32 %v1172, %v1185
        %v1187 = vpop.f32.mrf.mxu0
        %v1188 = vadd.f32 %v1174, %v1187
        %1189 = vdwg.mxu0
        %1190 = vmatpush.bf16.msra.mxu0 %v1121
        %1191 = vmatpush.bf16.msra.mxu0 %v1120
        %1192 = vmatpush.bf16.msra.mxu0 %v1119
        %1193 = vmatpush.bf16.msra.mxu0 %v1118
        %1194 = vmatpush.bf16.msra.mxu0 %v1117
        %1195 = vmatpush.bf16.msra.mxu0 %v1116
        %1196 = vmatpush.bf16.msra.mxu0 %v1115
        %1197 = vmatpush.bf16.msra.mxu0 %v1114
        %1198 = vmatmul.bf16.gmra.mxu0 %v902
        %v1199 = vpop.f32.mrf.mxu0
        %v1200 = vadd.f32 %v1186, %v1199
        %v1201 = vpop.f32.mrf.mxu0
        %v1202 = vadd.f32 %v1188, %v1201
        %1203 = vdwg.mxu0
        %1204 = vmatpush.bf16.msra.mxu0 %v1129
        %1205 = vmatpush.bf16.msra.mxu0 %v1128
        %1206 = vmatpush.bf16.msra.mxu0 %v1127
        %1207 = vmatpush.bf16.msra.mxu0 %v1126
        %1208 = vmatpush.bf16.msra.mxu0 %v1125
        %1209 = vmatpush.bf16.msra.mxu0 %v1124
        %1210 = vmatpush.bf16.msra.mxu0 %v1123
        %1211 = vmatpush.bf16.msra.mxu0 %v1122
        %1212 = vmatmul.bf16.gmra.mxu0 %v903
        %v1213 = vpop.f32.mrf.mxu0
        %v1214 = vadd.f32 %v1200, %v1213
        %v1215 = vpop.f32.mrf.mxu0
        %v1216 = vadd.f32 %v1202, %v1215
        %1217 = vdwg.mxu0
        %v1218 = vadd.f32 %v904, %v1214
        %v1219 = vadd.f32 %v905, %v1216
        %1220 = vst [vmem:[#allocation2] sm:$0xff] %v1218
        %1221 = vst [vmem:[#allocation2 + $0x8] sm:$0xff] %v1219
        %p1222 = scmp.eq.s32.totalorder %s28, 1
        // Predicated region
        $region57: #{tpu_custom_call.1} parent=35 // pred_check
          %p1223 = pneg %p1222
        $region58: #{tpu_custom_call.1} parent=35 // pred_check_branch
          %1225 = sbr.rel (%p1223) target = $region60
        $region59: #{tpu_custom_call.1} parent=35 // pred_region
          %v1226 = vld [vmem:[#allocation2] sm:$0xff]
          %v1227 = vld [vmem:[#allocation2 + $0x8] sm:$0xff]
          %1228 = vst [vmem:[#allocation11] sm:$0xff] %v1226
          %1229 = vst [vmem:[#allocation11 + $0x8] sm:$0xff] %v1227
        $region60: #{tpu_custom_call.1} parent=35 // pred_fallthru
          _
        // Predicated region
        $region61: #{tpu_custom_call.1} parent=35 // pred_check
          %p1230 = pneg %p157
        $region62: #{tpu_custom_call.1} parent=35 // pred_check_branch
          %1232 = sbr.rel (%p1230) target = $region64
        $region63: #{tpu_custom_call.1} parent=35 // pred_region
          %s1233 = smul.u32 2, %s27
          %1235 = vsyncadd [#allocation5], 0
          %s1236 = smul.addr %s1233, 8
          %s1237 = scalar_lea.hbm %s4, %s1236
          %s1238 = sshll.u32 [#allocation11], 4
          %s1239 = int_to_ptr.vmem [resolvable:$true] %s1238
          %s1240 = sshll.u32 %s1237, 4
          %s1241 = int_to_ptr.hbm [resolvable:$true] %s1240
          %1246 = dma.vmem_to_hbm [thread:$0]  %s1239, 256, %s1241, [#allocation5], 128, 128, 8
        $region64: #{tpu_custom_call.1} parent=35 // pred_fallthru
          _
        // Predicated region
        $region65: #{tpu_custom_call.1} parent=35 // pred_check
          %p1247 = pneg %p157
        $region66: #{tpu_custom_call.1} parent=35 // pred_check_branch
          %1249 = sbr.rel (%p1247) target = $region68
        $region67: #{tpu_custom_call.1} parent=35 // pred_region
          %1251 = dma.done [#allocation5], 256
        $region68: #{tpu_custom_call.1} parent=35 // pred_fallthru
          _
      $region36: #{tpu_custom_call.1} parent=5 // pred_fallthru
        _
      %p1252 = scmp.le.s32.totalorder 2, %s18
      // Predicated region
      $region69: #{tpu_custom_call.1} parent=5 // pred_check
        %p1253 = pneg %p1252
      $region70: #{tpu_custom_call.1} parent=5 // pred_check_branch
        %1255 = sbr.rel (%p1253) target = $region72
      $region71: #{tpu_custom_call.1} parent=5 // pred_region
        %s1256 = ssub.s32 %s18, 2
      $region72: #{tpu_custom_call.1} parent=5 // pred_fallthru
        _
    $region6: #{tpu_custom_call.1} parent=1 // loop_footer
      %s22 = sadd.s32 1, %s18
    $region7: #{tpu_custom_call.1} parent=1 // loop_footer_branch
      %17 = sbr.rel target = $region3
    $region8: #{tpu_custom_call.1} parent=1 // loop_exit
      _
    %1257 = vsyncpa [#allocation4], 1
    %s1258 = scalar_lea.sflag [#allocation4], 1
    %1259 = vsyncpa %s1258, 1
    %1260 = vsyncpa [#allocation7], 1
    %s1261 = scalar_lea.sflag [#allocation7], 1
    %1262 = vsyncpa %s1261, 1
    %1263 = vsyncpa [#allocation10], 1
    %s1264 = scalar_lea.sflag [#allocation10], 1
    %1265 = vsyncpa %s1264, 1
    %1266 = vsyncpa [#allocation5], 1
    %s1267 = scalar_lea.sflag [#allocation5], 1
    %1268 = vsyncpa %s1267, 1

</llo_original>
